<compile_context>
chip_gen: v6e
topology: v6e:2x2x1
jax: 0.10.0
libtpu: 0.0.40
codegen_flags: <defaults>
</compile_context>

<pallas_src>
import jax
import jax.numpy as jnp
from jax.experimental import pallas as pl
from jax.experimental.pallas import tpu as pltpu


def _round_up(x, m):
    return (x + m - 1) // m * m


def _vmem_limit_bytes():
    """Scoped-VMEM limit: half of physical VMEM, capped at 64 MiB."""
    try:
        phys = pltpu.get_tpu_info().vmem_capacity_bytes
    except Exception:
        phys = 64 * 1024 * 1024          # conservative (v7x-sized) fallback
    return int(min(phys // 2, 64 * 1024 * 1024))


def _patch_embed_kernel(p_ref, w_ref, b_ref, o_ref):
    # p_ref: (tm, K) bf16 patches, w_ref: (K, tn) bf16 weight (transposed),
    # b_ref: (1, tn) f32 bias, o_ref: (tm, tn) output in the caller's dtype.
    acc = jnp.dot(p_ref[...], w_ref[...], preferred_element_type=jnp.float32)
    o_ref[...] = (acc + b_ref[...]).astype(o_ref.dtype)


def patch_embed(x, weight, bias, patch_size):
    """x: (B, C, H, W); weight: (E, C, ph, pw) [Conv2d OIHW]; bias: (E,)."""
    B, C, H, W = x.shape
    ph, pw = patch_size
    if H % ph != 0 or W % pw != 0:
        raise ValueError(
            f"Image size ({H},{W}) must be divisible by patch size ({ph},{pw}).")
    gh, gw = H // ph, W // pw
    num_patches = gh * gw
    E = weight.shape[0]
    K = C * ph * pw
    M = B * num_patches
    out_dtype = x.dtype
    out_itemsize = jnp.dtype(out_dtype).itemsize

    # ---- patch flatten: a single fused XLA pass (read x, write bf16 p). ----
    # TODO(synk): move this flatten fully inside the kernel (in-VMEM relayout of
    # a raw NCHW block) so x is read from HBM exactly once; blocked on Mosaic
    # support for the rank-6 transpose with sub-lane-width trailing dims.
    p = x.astype(jnp.bfloat16).reshape(B, C, gh, ph, gw, pw)
    p = p.transpose(0, 2, 4, 1, 3, 5).reshape(M, K)        # (M, K), K-order (C,ph,pw)

    # Weight / bias (tiny): flatten to (K, E) matching the Conv2d contraction.
    w_t = weight.reshape(E, K).T.astype(jnp.bfloat16)      # (K, E)
    b2 = bias.astype(jnp.float32).reshape(1, E)            # (1, E)

    # Pad N only when embed_dim is not lane-aligned (keeps output stores
    # unmasked); the weight/bias are tiny so this pad is negligible.
    Np = _round_up(E, 128)
    if Np != E:
        w_t = jnp.pad(w_t, ((0, 0), (0, Np - E)))
        b2 = jnp.pad(b2, ((0, 0), (0, Np - E)))

    # ---- tile selection against the VMEM budget. ----
    vmem_limit = _vmem_limit_bytes()
    budget = (vmem_limit * 3) // 4

    # N tile: full Np unless the (double-buffered) weight block would hog VMEM.
    tn = 128
    for cand in (Np, 4096, 2048, 1024, 512, 256):
        if cand <= Np and 2 * K * cand * 2 <= budget // 3:
            tn = cand
            break
    grid_n = pl.cdiv(Np, tn)
    # TODO(synk): when grid_n == 1 the weight/bias blocks are grid-invariant;
    # mark them pipeline_mode=pl.Buffered(1) once verified on the target build
    # to halve their resident VMEM (budget below already accounts for 2 bufs).

    # M tile: as large as fits (double-buffered patch + output blocks), capped,
    # and split so the grid has >= 2 steps for v7x's two TensorCores.
    w_bytes = 2 * (K * tn * 2 + tn * 4)
    per_row = 2 * (K * 2 + tn * out_itemsize)
    tm_cap = max((budget - w_bytes) // max(per_row, 1), 8)
    tm_max = max(min((tm_cap // 8) * 8, 2048), 8)
    num_m_tiles = max(pl.cdiv(M, tm_max), 1)
    if num_m_tiles < 2 and M > 8:
        num_m_tiles = 2
    tm = min(_round_up(pl.cdiv(M, num_m_tiles), 8), _round_up(M, 8))
    grid_m = pl.cdiv(M, tm)

    cost = pl.CostEstimate(
        flops=2 * M * K * Np,
        transcendentals=0,
        bytes_accessed=2 * (M * K + K * Np) + 4 * Np + out_itemsize * M * Np,
    )

    out = pl.pallas_call(
        _patch_embed_kernel,
        out_shape=jax.ShapeDtypeStruct((M, Np), out_dtype),
        grid_spec=pltpu.PrefetchScalarGridSpec(
            num_scalar_prefetch=0,
            grid=(grid_m, grid_n),
            in_specs=[
                pl.BlockSpec((tm, K), lambda i, j: (i, 0)),   # patches
                pl.BlockSpec((K, tn), lambda i, j: (0, j)),   # weight
                pl.BlockSpec((1, tn), lambda i, j: (0, j)),   # bias
            ],
            out_specs=pl.BlockSpec((tm, tn), lambda i, j: (i, j)),
        ),
        compiler_params=pltpu.CompilerParams(
            dimension_semantics=("parallel", "parallel"),
            vmem_limit_bytes=vmem_limit,
            allow_input_fusion=[True, True, True],
        ),
        cost_estimate=cost,
    )(p, w_t, b2)

    if Np != E:
        out = out[:, :E]
    return out.reshape(B, num_patches, E)


def _reference(x, weight, bias, patch_size):
    """Plain-JAX f32 reference: Conv2d(stride=kernel) + flatten(2).transpose(1,2)."""
    y = jax.lax.conv_general_dilated(
        x.astype(jnp.float32), weight.astype(jnp.float32),
        window_strides=patch_size, padding="VALID",
        dimension_numbers=("NCHW", "OIHW", "NCHW"),
    ) + bias.astype(jnp.float32).reshape(1, -1, 1, 1)
    B, E, gh, gw = y.shape
    return y.reshape(B, E, gh * gw).transpose(0, 2, 1)


if __name__ == "__main__":
    # Small shapes consistent with the module: img=16, patch=4, C=4, embed=32.
    B, C, H, W = 2, 4, 16, 16
    ph = pw = 4
    embed_dim = 32

    key = jax.random.PRNGKey(0)
    kx, kw, kb = jax.random.split(key, 3)
    x = jax.random.normal(kx, (B, C, H, W), dtype=jnp.float32)
    weight = jax.random.normal(kw, (embed_dim, C, ph, pw), dtype=jnp.float32) * 0.02
    bias = jax.random.normal(kb, (embed_dim,), dtype=jnp.float32) * 0.02

    out = patch_embed(x, weight, bias, (ph, pw))
    out = jax.block_until_ready(out)

    ref = _reference(x, weight, bias, (ph, pw))
    assert out.shape == (B, (H // ph) * (W // pw), embed_dim), out.shape
    # bf16 MXU operands (f32 accumulation) -> slightly looser tolerance vs f32 ref.
    assert jnp.allclose(out, ref, atol=1e-2, rtol=1e-2), "mismatch vs reference"

    print("KERNEL_OK")
</pallas_src>

<mosaic_0001>
module attributes {stable_mosaic.version = 11 : i64} {
  func.func @_patch_embed_kernel(%arg0: i32, %arg1: i32, %arg2: memref<16x64xbf16, #tpu.memory_space<vmem>>, %arg3: memref<64x128xbf16, #tpu.memory_space<vmem>>, %arg4: memref<1x128xf32, #tpu.memory_space<vmem>>, %arg5: memref<16x128xf32, #tpu.memory_space<vmem>>) attributes {dimension_semantics = [#tpu.dimension_semantics<parallel>, #tpu.dimension_semantics<parallel>], iteration_bounds = array<i64: 2, 1>, scalar_prefetch = 0 : i64, scratch_operands = 0 : i64, tpu.core_type = #tpu.core_type<tc>, window_params = [{transform_indices = @transform_0, window_bounds = array<i64: 16, 64>}, {transform_indices = @transform_1, window_bounds = array<i64: 64, 128>}, {transform_indices = @transform_2, window_bounds = array<i64: 1, 128>}, {transform_indices = @transform_3, window_bounds = array<i64: 16, 128>}]} {
    %c0 = arith.constant 0 : index
    %c0_0 = arith.constant 0 : index
    %0 = vector.load %arg2[%c0, %c0_0] : memref<16x64xbf16, #tpu.memory_space<vmem>>, vector<16x64xbf16>
    %c0_1 = arith.constant 0 : index
    %c0_2 = arith.constant 0 : index
    %1 = vector.load %arg3[%c0_1, %c0_2] : memref<64x128xbf16, #tpu.memory_space<vmem>>, vector<64x128xbf16>
    %cst = arith.constant dense<0.000000e+00> : vector<16x128xf32>
    %2 = tpu.matmul %0, %1, %cst {dimension_numbers = #tpu.dot_dimension_numbers<[1], [0], [0], [1], [0, 0, 1, 1], [], []>} : vector<16x64xbf16>, vector<64x128xbf16>, vector<16x128xf32> -> vector<16x128xf32>
    %c0_3 = arith.constant 0 : index
    %c0_4 = arith.constant 0 : index
    %3 = vector.load %arg4[%c0_3, %c0_4] : memref<1x128xf32, #tpu.memory_space<vmem>>, vector<1x128xf32>
    %4 = vector.broadcast %3 : vector<1x128xf32> to vector<16x128xf32>
    %5 = arith.addf %2, %4 : vector<16x128xf32>
    %c0_5 = arith.constant 0 : index
    %c0_6 = arith.constant 0 : index
    %6 = vector.load %arg5[%c0_5, %c0_6] : memref<16x128xf32, #tpu.memory_space<vmem>>, vector<16x128xf32>
    tpu.vector_store %arg5[%c0_5, %c0_6], %5 {strides = array<i32>} : memref<16x128xf32, #tpu.memory_space<vmem>>, vector<16x128xf32>,
    return
  }
  func.func @transform_0(%arg0: i32, %arg1: i32) -> (i32, i32) {
    %c0_i32 = arith.constant 0 : i32
    %c0_i32_0 = arith.constant 0 : i32
    return %arg0, %c0_i32 : i32, i32
  }
  func.func @transform_1(%arg0: i32, %arg1: i32) -> (i32, i32) {
    %c0_i32 = arith.constant 0 : i32
    %c0_i32_0 = arith.constant 0 : i32
    return %c0_i32, %arg1 : i32, i32
  }
  func.func @transform_2(%arg0: i32, %arg1: i32) -> (i32, i32) {
    %c0_i32 = arith.constant 0 : i32
    %c0_i32_0 = arith.constant 0 : i32
    return %c0_i32, %arg1 : i32, i32
  }
  func.func @transform_3(%arg0: i32, %arg1: i32) -> (i32, i32) {
    %c0_i32 = arith.constant 0 : i32
    return %arg0, %arg1 : i32, i32
  }
}

</mosaic_0001>

<llo_original>
// kernel: tpu_custom_call.1
$region0: #{tpu_custom_call.1}
  #allocation0 [shape = 'u32[]', space=smem, size = 0x4, offset = 0x4, fixed_abs, tag = 'smem constant byte address 0x4 - core index']
  #allocation1 [shape = 'u32[144,128]{1,0:T(1,128)}', space=vmem, size = 0x12000, scoped, tag = 'internal scratch']
  %s0 = inlined_call_operand.hbm [shape: bf16[32,64], index: 0, kind: input, shape index: {}]
  %s1 = inlined_call_operand.hbm [shape: bf16[64,128], index: 1, kind: input, shape index: {}]
  %s2 = inlined_call_operand.vmem [shape: f32[1,128], index: 2, kind: input, shape index: {}]
  %s3 = inlined_call_operand.hbm [shape: f32[32,128], index: 3, kind: output, shape index: {}]
  %s4 = sld [smem:[#allocation0]]
  $region53: #{tpu_custom_call.1} parent=0
    _
  %s6 = ssub.s32 1, %s4
  %s7 = scalar_select 0, %s6, %s4
  $region1: #{tpu_custom_call.1} parent=0
    #allocation2 [shape = 'u8[8192]{0}', space=vmem, size = 0x2000, scoped, tag = 'input window, operand 0']
    #allocation3 [shape = 's32[2]{0}', space=sflag, size = 0x8, scoped, tag = 'scoped memory for tpu_custom_call.1']
    #allocation4 [shape = 's32[2]{0}', space=sflag, size = 0x8, scoped, tag = 'scoped memory for tpu_custom_call.1']
    #allocation5 [shape = 'u8[16384]{0}', space=vmem, size = 0x4000, scoped, tag = 'input window, operand 1, single buffered']
    #allocation6 [shape = 's32[1]{0}', space=sflag, size = 0x4, scoped, tag = 'scoped memory for tpu_custom_call.1']
    #allocation7 [shape = 'u8[16384]{0}', space=vmem, size = 0x4000, scoped, tag = 'output window, operand 0']
    %8 = vsyncpa [#allocation3], 0
    %s9 = scalar_lea.sflag [#allocation3], 1
    %10 = vsyncpa %s9, 0
    %11 = vsyncpa [#allocation6], 0
    %12 = vsyncpa [#allocation4], 0
    %s13 = scalar_lea.sflag [#allocation4], 1
    %14 = vsyncpa %s13, 0
    loop: start=0, step=1, limit=4
    $region2: #{tpu_custom_call.1} parent=1 // loop_pre_header
      _
    $region3: #{tpu_custom_call.1} parent=1 // loop_header
      %s16 = sphi 0, %s20
      %p17 = scmp.ge.s32.totalorder %s16, 4
      %s23 = sphi 0, %s35
      %s24 = sphi 0, %s31
      %s25 = sphi 0, %s23
      %s26 = sphi 0, %s24
      %s27 = sphi 0, %s25
      %s28 = sphi 0, %s26
      %s38 = sphi 0, %s40
      %s41 = sphi 0, %s38
      %s42 = sphi 0, %s41
      %s58 = sphi 0, %s42
      %s64 = sphi 0, %s66
      %s67 = sphi 0, %s64
      %s68 = sphi 0, %s67
      %s84 = sphi 0, %s68
      %s90 = sphi 0, %s92
      %s93 = sphi 0, %s90
      %s94 = sphi 0, %s93
      %s110 = sphi 0, %s94
      %s118 = sphi 0, %s120
      %s121 = sphi 0, %s118
      %s122 = sphi 0, %s121
      %s138 = sphi 0, %s122
    $region4: #{tpu_custom_call.1} parent=1 // loop_header_branch
      %19 = sbr.rel (%p17) target = $region8
    $region5: #{tpu_custom_call.1} parent=1 // loop_body
      %s21 = ssub.s32 %s16, 1
      %s22 = ssub.s32 %s16, 2
      %s29 = sadd.s32 1, %s24
      %p30 = scmp.ge.s32.totalorder %s29, 1
      %s31 = scalar_select %p30, 0, %s29
      %s32 = sadd.s32 1, %s23
      %s33 = scalar_select %p30, %s32, %s23
      %p34 = scmp.ge.s32.totalorder %s33, 2
      %s35 = scalar_select %p34, 0, %s33
      %s36 = ssub.s32 %s23, %s35
      %p37 = scmp.eq.s32.totalorder %s36, 0
      %s39 = sadd.s32 %s38, 1
      %s40 = scalar_select %p37, %s38, %s39
      %p43 = pneg %p37
      %p44 = scmp.eq.s32.totalorder %s16, 1
      %p45 = por %p43, %p44
      %p46 = scmp.ne.s32.totalorder %s38, %s41
      %p47 = scmp.eq.s32.totalorder %s16, 0
      %p48 = por %p46, %p47
      %p49 = scmp.ne.s32.totalorder %s38, %s41
      %p50 = scmp.eq.s32.totalorder %s21, 1
      %p51 = por %p49, %p50
      %p52 = scmp.ne.s32.totalorder %s41, %s42
      %p53 = scmp.eq.s32.totalorder %s21, 0
      %p54 = por %p52, %p53
      %p55 = scmp.ne.s32.totalorder %s41, %s42
      %p56 = scmp.eq.s32.totalorder %s22, 1
      %p57 = por %p55, %p56
      %p59 = scmp.ne.s32.totalorder %s42, %s58
      %p60 = scmp.eq.s32.totalorder %s22, 0
      %p61 = por %p59, %p60
      %s62 = ssub.s32 %s24, %s31
      %p63 = scmp.eq.s32.totalorder %s62, 0
      %s65 = sadd.s32 %s64, 1
      %s66 = scalar_select %p63, %s64, %s65
      %p69 = pneg %p63
      %p70 = scmp.eq.s32.totalorder %s16, 1
      %p71 = por %p69, %p70
      %p72 = scmp.ne.s32.totalorder %s64, %s67
      %p73 = scmp.eq.s32.totalorder %s16, 0
      %p74 = por %p72, %p73
      %p75 = scmp.ne.s32.totalorder %s64, %s67
      %p76 = scmp.eq.s32.totalorder %s21, 1
      %p77 = por %p75, %p76
      %p78 = scmp.ne.s32.totalorder %s67, %s68
      %p79 = scmp.eq.s32.totalorder %s21, 0
      %p80 = por %p78, %p79
      %p81 = scmp.ne.s32.totalorder %s67, %s68
      %p82 = scmp.eq.s32.totalorder %s22, 1
      %p83 = por %p81, %p82
      %p85 = scmp.ne.s32.totalorder %s68, %s84
      %p86 = scmp.eq.s32.totalorder %s22, 0
      %p87 = por %p85, %p86
      %s88 = ssub.s32 %s24, %s31
      %p89 = scmp.eq.s32.totalorder %s88, 0
      %s91 = sadd.s32 %s90, 1
      %s92 = scalar_select %p89, %s90, %s91
      %p95 = pneg %p89
      %p96 = scmp.eq.s32.totalorder %s16, 1
      %p97 = por %p95, %p96
      %p98 = scmp.ne.s32.totalorder %s90, %s93
      %p99 = scmp.eq.s32.totalorder %s16, 0
      %p100 = por %p98, %p99
      %p101 = scmp.ne.s32.totalorder %s90, %s93
      %p102 = scmp.eq.s32.totalorder %s21, 1
      %p103 = por %p101, %p102
      %p104 = scmp.ne.s32.totalorder %s93, %s94
      %p105 = scmp.eq.s32.totalorder %s21, 0
      %p106 = por %p104, %p105
      %p107 = scmp.ne.s32.totalorder %s93, %s94
      %p108 = scmp.eq.s32.totalorder %s22, 1
      %p109 = por %p107, %p108
      %p111 = scmp.ne.s32.totalorder %s94, %s110
      %p112 = scmp.eq.s32.totalorder %s22, 0
      %p113 = por %p111, %p112
      %s114 = ssub.s32 %s23, %s35
      %s115 = ssub.s32 %s24, %s31
      %s116 = sor.u32 %s114, %s115
      %p117 = scmp.eq.s32.totalorder %s116, 0
      %s119 = sadd.s32 %s118, 1
      %s120 = scalar_select %p117, %s118, %s119
      %p123 = pneg %p117
      %p124 = scmp.eq.s32.totalorder %s16, 1
      %p125 = por %p123, %p124
      %p126 = scmp.ne.s32.totalorder %s118, %s121
      %p127 = scmp.eq.s32.totalorder %s16, 0
      %p128 = por %p126, %p127
      %p129 = scmp.ne.s32.totalorder %s118, %s121
      %p130 = scmp.eq.s32.totalorder %s21, 1
      %p131 = por %p129, %p130
      %p132 = scmp.ne.s32.totalorder %s121, %s122
      %p133 = scmp.eq.s32.totalorder %s21, 0
      %p134 = por %p132, %p133
      %p135 = scmp.ne.s32.totalorder %s121, %s122
      %p136 = scmp.eq.s32.totalorder %s22, 1
      %p137 = por %p135, %p136
      %p139 = scmp.ne.s32.totalorder %s122, %s138
      %p140 = scmp.eq.s32.totalorder %s22, 0
      %p141 = por %p139, %p140
      %p142 = scmp.le.s32.totalorder 1, %s16
      %p143 = scmp.lt.s32.totalorder %s16, 3
      %p144 = pnand %p142, %p143
      %p145 = pneg %p144
      // Predicated region
      $region9: #{tpu_custom_call.1} parent=5 // pred_check
        _
      $region10: #{tpu_custom_call.1} parent=5 // pred_check_branch
        %147 = sbr.rel (%p144) target = $region12
      $region11: #{tpu_custom_call.1} parent=5 // pred_region
        %s148 = ssub.s32 %s16, 1
        // Predicated region
        $region13: #{tpu_custom_call.1} parent=11 // pred_check
          %p149 = pneg %p80
        $region14: #{tpu_custom_call.1} parent=11 // pred_check_branch
          %151 = sbr.rel (%p149) target = $region16
        $region15: #{tpu_custom_call.1} parent=11 // pred_region
          %s153 = ssub.s32 512, 512
          %154 = vsyncadd [#allocation6], %s153
          %s155 = smul.addr %s26, 64
          %s156 = scalar_lea.hbm %s1, %s155
          %s157 = sshll.u32 [#allocation5], 4
          %s158 = int_to_ptr.vmem [resolvable:$true] %s157
          %163 = dma.hbm_to_vmem [thread:$0]  %s156, 512, %s158, [#allocation6], 64, 64, 4
        $region16: #{tpu_custom_call.1} parent=11 // pred_fallthru
          _
        // Predicated region
        $region17: #{tpu_custom_call.1} parent=11 // pred_check
          %p164 = pneg %p106
        $region18: #{tpu_custom_call.1} parent=11 // pred_check_branch
          %166 = sbr.rel (%p164) target = $region20
        $region19: #{tpu_custom_call.1} parent=11 // pred_region
          %p167 = scmp.lt.s32.totalorder %s26, 0
          %s168 = scalar_select %p167, %s26, 0
          %s169 = scalar_lea.vmem %s2, %s168
        $region20: #{tpu_custom_call.1} parent=11 // pred_fallthru
          _
      $region12: #{tpu_custom_call.1} parent=5 // pred_fallthru
        _
      %p170 = scmp.lt.s32.totalorder %s16, 2
      // Predicated region
      $region21: #{tpu_custom_call.1} parent=5 // pred_check
        %p171 = pneg %p170
      $region22: #{tpu_custom_call.1} parent=5 // pred_check_branch
        %173 = sbr.rel (%p171) target = $region24
      $region23: #{tpu_custom_call.1} parent=5 // pred_region
        // Predicated region
        $region25: #{tpu_custom_call.1} parent=23 // pred_check
          %p174 = pneg %p48
        $region26: #{tpu_custom_call.1} parent=23 // pred_check_branch
          %176 = sbr.rel (%p174) target = $region28
        $region27: #{tpu_custom_call.1} parent=23 // pred_region
          %s177 = sand.u32 %s38, 1
          %s178 = scalar_lea.sflag [#allocation3], %s177
          %s179 = sand.u32 %s38, 1
          %s180 = smul.addr %s179, 8
          %s181 = scalar_lea.vmem [#allocation2], %s180
          %s182 = smul.u32 2, %s23
          %s184 = ssub.s32 128, 128
          %185 = vsyncadd %s178, %s184
          %s186 = smul.addr %s182, 64
          %s187 = scalar_lea.hbm %s0, %s186
          %s188 = sshll.u32 %s181, 4
          %s189 = int_to_ptr.vmem [resolvable:$true] %s188
          %194 = dma.hbm_to_vmem [thread:$0]  %s187, 128, %s189, %s178, 64, 64, 4
        $region28: #{tpu_custom_call.1} parent=23 // pred_fallthru
          _
      $region24: #{tpu_custom_call.1} parent=5 // pred_fallthru
        _
      %p195 = scmp.le.s32.totalorder 1, %s16
      %p196 = scmp.lt.s32.totalorder %s16, 3
      %p197 = pnand %p195, %p196
      %p198 = pneg %p197
      // Predicated region
      $region29: #{tpu_custom_call.1} parent=5 // pred_check
        _
      $region30: #{tpu_custom_call.1} parent=5 // pred_check_branch
        %200 = sbr.rel (%p197) target = $region32
      $region31: #{tpu_custom_call.1} parent=5 // pred_region
        %s201 = ssub.s32 %s16, 1
        %s202 = sand.u32 %s41, 1
        %s203 = scalar_lea.sflag [#allocation3], %s202
        %s204 = sand.u32 %s41, 1
        %s205 = smul.addr %s204, 8
        %s206 = scalar_lea.vmem [#allocation2], %s205
        // Predicated region
        $region33: #{tpu_custom_call.1} parent=31 // pred_check
          %p207 = pneg %p54
        $region34: #{tpu_custom_call.1} parent=31 // pred_check_branch
          %209 = sbr.rel (%p207) target = $region36
        $region35: #{tpu_custom_call.1} parent=31 // pred_region
          %210 = dma.done %s203, 128
        $region36: #{tpu_custom_call.1} parent=31 // pred_fallthru
          _
        // Predicated region
        $region37: #{tpu_custom_call.1} parent=31 // pred_check
          %p211 = pneg %p80
        $region38: #{tpu_custom_call.1} parent=31 // pred_check_branch
          %213 = sbr.rel (%p211) target = $region40
        $region39: #{tpu_custom_call.1} parent=31 // pred_region
          %214 = dma.done [#allocation6], 512
        $region40: #{tpu_custom_call.1} parent=31 // pred_fallthru
          _
        %s215 = sand.u32 %s41, 1
        %s216 = scalar_lea.sflag [#allocation3], %s215
        %s217 = sand.u32 %s41, 1
        %s218 = smul.addr %s217, 8
        %s219 = scalar_lea.vmem [#allocation2], %s218
        %p220 = pneg %p54
        %p221 = pneg %p51
        %p222 = pneg %p80
        %p223 = pneg %p77
        %p224 = scmp.lt.s32.totalorder %s26, 0
        %s225 = scalar_select %p224, %s26, 0
        %s226 = scalar_lea.vmem %s2, %s225
        %p227 = pneg %p106
        %p228 = pneg %p103
        %p229 = pneg %p134
        %p230 = pneg %p131
        %s231 = sand.u32 %s121, 1
        %s232 = scalar_lea.sflag [#allocation4], %s231
        %s233 = sand.u32 %s121, 1
        %s234 = smul.addr %s233, 16
        %s235 = scalar_lea.vmem [#allocation7], %s234
        %s236 = smul.u32 2, %s25
        %p237 = scmp.lt.s32.totalorder %s26, 0
        %s238 = scalar_select %p237, %s26, 0
        %s239 = scalar_lea.vmem %s2, %s238
        %s240 = smul.u32 2, %s25
        %v242 = vld [vmem:[%s206] sm:$0xf]
        %v243 = vld [vmem:[%s206 + $0x4] sm:$0xf]
        %v244 = vld [vmem:[#allocation5] sm:$0xf]
        %v245 = vld [vmem:[#allocation5 + $0x4] sm:$0xf]
        %v246 = vld [vmem:[#allocation5 + $0x8] sm:$0xf]
        %v247 = vld [vmem:[#allocation5 + $0xc] sm:$0xf]
        %v248 = vld [vmem:[#allocation5 + $0x10] sm:$0xf]
        %v249 = vld [vmem:[#allocation5 + $0x14] sm:$0xf]
        %v250 = vld [vmem:[#allocation5 + $0x18] sm:$0xf]
        %v251 = vld [vmem:[#allocation5 + $0x1c] sm:$0xf]
        %v252 = vld [vmem:[%s239] sm:$0x1]
        %v254 = vlaneseq
        %v255 = vshrl.u32 %v254, 7
        %v256 = vsub.s32 0, %v255
        %v257 = vrot.slane %v252, %v256
        %v261 = vunpack.c.l.b16 %v242
        %v262 = vunpack.c.l.b16 %v243
        %v263 = vpack.c.b16 %v262, %v261
        %v272 = vunpack.c.l.b16 %v244
        %v273 = vunpack.c.l.b16 %v245
        %v274 = vunpack.c.l.b16 %v246
        %v275 = vunpack.c.l.b16 %v247
        %v276 = vunpack.c.l.b16 %v248
        %v277 = vunpack.c.l.b16 %v249
        %v278 = vunpack.c.l.b16 %v250
        %v279 = vunpack.c.l.b16 %v251
        %v280 = vpack.c.b16 %v273, %v272
        %v281 = vpack.c.b16 %v275, %v274
        %v282 = vpack.c.b16 %v277, %v276
        %v283 = vpack.c.b16 %v279, %v278
        %vm288 = vcmask 523264
        %v290 = vsel %vm288, %v263, 0
        %292 = vmatprep.subr.bf16.mxu0 0
        %293 = vmatpush1.bf16.msra.mxu0 0
        %294 = vmatprep.subr.bf16.mxu0 0
        %295 = vmatpush1.bf16.msra.mxu0 0
        %296 = vmatprep.subr.bf16.mxu0 0
        %297 = vmatpush1.bf16.msra.mxu0 0
        %298 = vmatprep.subr.bf16.mxu0 0
        %299 = vmatpush1.bf16.msra.mxu0 0
        %300 = vmatprep.subr.bf16.mxu0 0
        %301 = vmatpush1.bf16.msra.mxu0 %v283
        %302 = vmatprep.subr.bf16.mxu0 0
        %303 = vmatpush1.bf16.msra.mxu0 %v282
        %304 = vmatprep.subr.bf16.mxu0 0
        %305 = vmatpush1.bf16.msra.mxu0 %v281
        %306 = vmatprep.subr.bf16.mxu0 0
        %307 = vmatpush1.bf16.msra.mxu0 %v280
        %308 = vmatprep.subr.bf16.mxu0 0
        %309 = vmatpush2.bf16.msra.mxu0 0
        %310 = vmatprep.subr.bf16.mxu0 0
        %311 = vmatpush2.bf16.msra.mxu0 0
        %312 = vmatprep.subr.bf16.mxu0 0
        %313 = vmatpush2.bf16.msra.mxu0 0
        %314 = vmatprep.subr.bf16.mxu0 0
        %315 = vmatpush2.bf16.msra.mxu0 0
        %316 = vmatprep.subr.bf16.mxu0 0
        %317 = vmatpush2.bf16.msra.mxu0 0
        %318 = vmatprep.subr.bf16.mxu0 0
        %319 = vmatpush2.bf16.msra.mxu0 0
        %320 = vmatprep.subr.bf16.mxu0 0
        %321 = vmatpush2.bf16.msra.mxu0 0
        %322 = vmatprep.subr.bf16.mxu0 0
        %323 = vmatpush2.bf16.msra.mxu0 0
        %324 = vmatprep.mubr.bf16.mxu0 0
        %325 = vmatmul.mubr.bf16.gmra.mxu0 %v290
        %v326 = vpop.f32.mrf.mxu0
        %v327 = vadd.f32 %v257, %v326
        %v328 = vpop.f32.mrf.mxu0
        %v329 = vpop.f32.mrf.mxu0
        %v330 = vadd.f32 %v257, %v329
        %v331 = vpop.f32.mrf.mxu0
        %332 = vdwg.mxu0
        %333 = vst [vmem:[%s235] sm:$0xff] %v327
        %334 = vst [vmem:[%s235 + $0x8] sm:$0xff] %v330
        %s335 = sand.u32 %s121, 1
        %s336 = scalar_lea.sflag [#allocation4], %s335
        %s337 = sand.u32 %s121, 1
        %s338 = smul.addr %s337, 16
        %s339 = scalar_lea.vmem [#allocation7], %s338
        // Predicated region
        $region41: #{tpu_custom_call.1} parent=31 // pred_check
          %p340 = pneg %p131
        $region42: #{tpu_custom_call.1} parent=31 // pred_check_branch
          %342 = sbr.rel (%p340) target = $region44
        $region43: #{tpu_custom_call.1} parent=31 // pred_region
          %s343 = smul.u32 2, %s25
          %s345 = ssub.s32 256, 256
          %346 = vsyncadd %s336, %s345
          %s347 = sadd.s32 %s26, %s343
          %s348 = smul.addr %s347, 128
          %s349 = scalar_lea.hbm %s3, %s348
          %s350 = sshll.u32 %s339, 4
          %s351 = int_to_ptr.vmem [resolvable:$true] %s350
          %356 = dma.vmem_to_hbm [thread:$0]  %s351, 256, %s349, %s336, 128, 128, 8
        $region44: #{tpu_custom_call.1} parent=31 // pred_fallthru
          _
      $region32: #{tpu_custom_call.1} parent=5 // pred_fallthru
        _
      %p357 = scmp.le.s32.totalorder 2, %s16
      // Predicated region
      $region45: #{tpu_custom_call.1} parent=5 // pred_check
        %p358 = pneg %p357
      $region46: #{tpu_custom_call.1} parent=5 // pred_check_branch
        %360 = sbr.rel (%p358) target = $region48
      $region47: #{tpu_custom_call.1} parent=5 // pred_region
        %s361 = ssub.s32 %s16, 2
        // Predicated region
        $region49: #{tpu_custom_call.1} parent=47 // pred_check
          %p362 = pneg %p137
        $region50: #{tpu_custom_call.1} parent=47 // pred_check_branch
          %364 = sbr.rel (%p362) target = $region52
        $region51: #{tpu_custom_call.1} parent=47 // pred_region
          %s365 = sand.u32 %s122, 1
          %s366 = scalar_lea.sflag [#allocation4], %s365
          %s367 = sand.u32 %s122, 1
          %s368 = smul.addr %s367, 16
          %s369 = scalar_lea.vmem [#allocation7], %s368
          %370 = dma.done %s366, 256
        $region52: #{tpu_custom_call.1} parent=47 // pred_fallthru
          _
      $region48: #{tpu_custom_call.1} parent=5 // pred_fallthru
        _
    $region6: #{tpu_custom_call.1} parent=1 // loop_footer
      %s20 = sadd.s32 1, %s16
    $region7: #{tpu_custom_call.1} parent=1 // loop_footer_branch
      %15 = sbr.rel target = $region3
    $region8: #{tpu_custom_call.1} parent=1 // loop_exit
      _
    %371 = vsyncpa [#allocation3], 1
    %s372 = scalar_lea.sflag [#allocation3], 1
    %373 = vsyncpa %s372, 1
    %374 = vsyncpa [#allocation6], 1
    %375 = vsyncpa [#allocation4], 1
    %s376 = scalar_lea.sflag [#allocation4], 1
    %377 = vsyncpa %s376, 1

</llo_original>
